<compile_context>
chip_gen: v6e
topology: v6e:2x2x1
jax: 0.10.0
libtpu: 0.0.40
codegen_flags: <defaults>
</compile_context>

<pallas_src>
import jax
import jax.numpy as jnp
import numpy as np
from jax.experimental import pallas as pl
from jax.experimental.pallas import tpu as pltpu


def _fk_kernel(params_ref, out_ref):
    """Gridless single-block kernel; the whole problem fits in SMEM/VMEM.

    params_ref: (10*n,) f32 SMEM — per link i: [r00,r01,r02,r10,r11,r12,r20,r21,r22, l_i]
    out_ref:    (n, 3)   f32 VMEM

    Math (equivalent to the reference nested recursion):
        M_i = R_0 @ R_1 @ ... @ R_i          (cumulative product)
        p_i = p_{i-1} + l_i * M_i[:, 2]
    M_i^T is carried as three (1, 3) row vectors (row r of M^T == column r of M); each update is
    three scalar x (1,3) FMAs whose scalars come straight from SMEM.
    """
    n = out_ref.shape[0]

    # Identity rows of M^T, built in-kernel (iota + compare) so no array constants are captured.
    lane = jax.lax.broadcasted_iota(jnp.int32, (1, 3), 1)
    mt = [jnp.where(lane == r, 1.0, 0.0).astype(jnp.float32) for r in range(3)]
    p = jnp.zeros((1, 3), dtype=jnp.float32)

    for i in range(n):                         # n is static & tiny -> fully unrolled
        base = 10 * i
        # Scalar loads from SMEM (static offsets; scalar slot, off the vector critical path).
        R = [[params_ref[base + 3 * row + col] for col in range(3)] for row in range(3)]
        li = params_ref[base + 9]

        # M_i^T = R_i^T @ M_{i-1}^T  =>  new row c = sum_k R_i[k, c] * old row k.
        mt = [R[0][c] * mt[0] + R[1][c] * mt[1] + R[2][c] * mt[2] for c in range(3)]

        # p_i = p_{i-1} + l_i * (column 2 of M_i)   (column 2 of M_i as a row == mt[2]).
        p = p + li * mt[2]

        # Store this end-effector position directly into its output row.
        out_ref[i:i + 1, :] = p


@jax.jit
def forward_kinematics(theta, link_lengths):
    """theta: (num_links, 3) f32, link_lengths: (num_links,) f32 -> (num_links, 3) f32."""
    n = theta.shape[0]
    theta = theta.astype(jnp.float32)
    lengths = link_lengths.astype(jnp.float32).reshape(n)

    # One small fused XLA elementwise op: trig + closed-form R entries. Doing this here keeps the
    # kernel body to the pure sequential recurrence and avoids f32 "scalar" algebra in Mosaic.
    sa, sb, sc = theta[:, 0], theta[:, 1], theta[:, 2]
    ca, cb, cc = jnp.cos(sa), jnp.cos(sb), jnp.cos(sc)
    sa, sb, sc = jnp.sin(sa), jnp.sin(sb), jnp.sin(sc)
    # R = Rz(c) @ Ry(b) @ Rx(a), closed form, per link (each entry is shape (n,)).
    r00 = cb * cc
    r01 = sa * sb * cc - ca * sc
    r02 = ca * sb * cc + sa * sc
    r10 = cb * sc
    r11 = sa * sb * sc + ca * cc
    r12 = ca * sb * sc - sa * cc
    r20 = -sb
    r21 = sa * cb
    r22 = ca * cb
    # Single flat SMEM buffer: [r00..r22, length] per link -> (10*n,). One DMA, one SMEM region.
    params = jnp.stack([r00, r01, r02, r10, r11, r12, r20, r21, r22, lengths],
                       axis=1).reshape(-1)

    return pl.pallas_call(
        _fk_kernel,
        out_shape=jax.ShapeDtypeStruct((n, 3), jnp.float32),
        in_specs=[pl.BlockSpec(memory_space=pltpu.MemorySpace.SMEM)],
        out_specs=pl.BlockSpec(memory_space=pltpu.MemorySpace.VMEM),
    )(params)


def _reference(theta, link_lengths):
    """Pure numpy transcription of the PyTorch module for verification."""
    theta = np.asarray(theta, dtype=np.float32)
    link_lengths = np.asarray(link_lengths, dtype=np.float32)
    rots = []
    for t in theta:
        a, b, c = t
        rx = np.array([[1, 0, 0],
                       [0, np.cos(a), -np.sin(a)],
                       [0, np.sin(a), np.cos(a)]], dtype=np.float32)
        ry = np.array([[np.cos(b), 0, np.sin(b)],
                       [0, 1, 0],
                       [-np.sin(b), 0, np.cos(b)]], dtype=np.float32)
        rz = np.array([[np.cos(c), -np.sin(c), 0],
                       [np.sin(c), np.cos(c), 0],
                       [0, 0, 1]], dtype=np.float32)
        rots.append(rz @ ry @ rx)
    outs = []
    for i in range(len(link_lengths)):
        eff = np.zeros((3, 1), dtype=np.float32)
        for j in range(i, -1, -1):
            trans = np.array([[0.0], [0.0], [1.0]], dtype=np.float32) * link_lengths[j]
            eff = rots[j] @ (eff + trans)
        outs.append(eff)
    return np.stack(outs).squeeze(2)


if __name__ == "__main__":
    num_links = 8
    key = jax.random.PRNGKey(0)
    k1, k2 = jax.random.split(key)
    # The module inits theta to zeros; random values are used here so the rotation math is
    # actually exercised. Link lengths are the forward() input.
    theta = 0.3 * jax.random.normal(k1, (num_links, 3), dtype=jnp.float32)
    link_lengths = jax.random.uniform(k2, (num_links,), dtype=jnp.float32,
                                      minval=0.5, maxval=1.5)

    out = forward_kinematics(theta, link_lengths)
    out = jax.block_until_ready(out)

    ref = _reference(theta, link_lengths)
    assert out.shape == (num_links, 3), out.shape
    np.testing.assert_allclose(np.asarray(out), ref, rtol=1e-4, atol=1e-5)
    print("KERNEL_OK")
</pallas_src>

<mosaic_0001>
module attributes {stable_mosaic.version = 11 : i64} {
  func.func @_fk_kernel(%arg0: memref<80xf32, #tpu.memory_space<smem>>, %arg1: memref<8x3xf32, #tpu.memory_space<vmem>>) attributes {dimension_semantics = [], scalar_prefetch = 0 : i64, scratch_operands = 0 : i64, tpu.core_type = #tpu.core_type<tc>} {
    %0 = tpu.iota {dimensions = array<i32: 1>} : vector<1x3xi32>
    %c0_i32 = arith.constant 0 : i32
    %1 = vector.broadcast %c0_i32 : i32 to vector<1x3xi32>
    %2 = arith.cmpi eq, %0, %1 : vector<1x3xi32>
    %cst = arith.constant 1.000000e+00 : f32
    %cst_0 = arith.constant 0.000000e+00 : f32
    %3 = vector.broadcast %cst : f32 to vector<1x3xf32>
    %4 = vector.broadcast %cst_0 : f32 to vector<1x3xf32>
    %5 = arith.select %2, %3, %4 : vector<1x3xi1>, vector<1x3xf32>
    %c1_i32 = arith.constant 1 : i32
    %6 = vector.broadcast %c1_i32 : i32 to vector<1x3xi32>
    %7 = arith.cmpi eq, %0, %6 : vector<1x3xi32>
    %cst_1 = arith.constant 1.000000e+00 : f32
    %cst_2 = arith.constant 0.000000e+00 : f32
    %8 = vector.broadcast %cst_1 : f32 to vector<1x3xf32>
    %9 = vector.broadcast %cst_2 : f32 to vector<1x3xf32>
    %10 = arith.select %7, %8, %9 : vector<1x3xi1>, vector<1x3xf32>
    %c2_i32 = arith.constant 2 : i32
    %11 = vector.broadcast %c2_i32 : i32 to vector<1x3xi32>
    %12 = arith.cmpi eq, %0, %11 : vector<1x3xi32>
    %cst_3 = arith.constant 1.000000e+00 : f32
    %cst_4 = arith.constant 0.000000e+00 : f32
    %13 = vector.broadcast %cst_3 : f32 to vector<1x3xf32>
    %14 = vector.broadcast %cst_4 : f32 to vector<1x3xf32>
    %15 = arith.select %12, %13, %14 : vector<1x3xi1>, vector<1x3xf32>
    %cst_5 = arith.constant 0.000000e+00 : f32
    %16 = vector.broadcast %cst_5 : f32 to vector<1x3xf32>
    %c0 = arith.constant 0 : index
    %17 = memref.load %arg0[%c0] : memref<80xf32, #tpu.memory_space<smem>>
    %c1 = arith.constant 1 : index
    %18 = memref.load %arg0[%c1] : memref<80xf32, #tpu.memory_space<smem>>
    %c2 = arith.constant 2 : index
    %19 = memref.load %arg0[%c2] : memref<80xf32, #tpu.memory_space<smem>>
    %c3 = arith.constant 3 : index
    %20 = memref.load %arg0[%c3] : memref<80xf32, #tpu.memory_space<smem>>
    %c4 = arith.constant 4 : index
    %21 = memref.load %arg0[%c4] : memref<80xf32, #tpu.memory_space<smem>>
    %c5 = arith.constant 5 : index
    %22 = memref.load %arg0[%c5] : memref<80xf32, #tpu.memory_space<smem>>
    %c6 = arith.constant 6 : index
    %23 = memref.load %arg0[%c6] : memref<80xf32, #tpu.memory_space<smem>>
    %c7 = arith.constant 7 : index
    %24 = memref.load %arg0[%c7] : memref<80xf32, #tpu.memory_space<smem>>
    %c8 = arith.constant 8 : index
    %25 = memref.load %arg0[%c8] : memref<80xf32, #tpu.memory_space<smem>>
    %c9 = arith.constant 9 : index
    %26 = memref.load %arg0[%c9] : memref<80xf32, #tpu.memory_space<smem>>
    %27 = vector.broadcast %17 : f32 to vector<1x3xf32>
    %28 = arith.mulf %27, %5 : vector<1x3xf32>
    %29 = vector.broadcast %20 : f32 to vector<1x3xf32>
    %30 = arith.mulf %29, %10 : vector<1x3xf32>
    %31 = arith.addf %28, %30 : vector<1x3xf32>
    %32 = vector.broadcast %23 : f32 to vector<1x3xf32>
    %33 = arith.mulf %32, %15 : vector<1x3xf32>
    %34 = arith.addf %31, %33 : vector<1x3xf32>
    %35 = vector.broadcast %18 : f32 to vector<1x3xf32>
    %36 = arith.mulf %35, %5 : vector<1x3xf32>
    %37 = vector.broadcast %21 : f32 to vector<1x3xf32>
    %38 = arith.mulf %37, %10 : vector<1x3xf32>
    %39 = arith.addf %36, %38 : vector<1x3xf32>
    %40 = vector.broadcast %24 : f32 to vector<1x3xf32>
    %41 = arith.mulf %40, %15 : vector<1x3xf32>
    %42 = arith.addf %39, %41 : vector<1x3xf32>
    %43 = vector.broadcast %19 : f32 to vector<1x3xf32>
    %44 = arith.mulf %43, %5 : vector<1x3xf32>
    %45 = vector.broadcast %22 : f32 to vector<1x3xf32>
    %46 = arith.mulf %45, %10 : vector<1x3xf32>
    %47 = arith.addf %44, %46 : vector<1x3xf32>
    %48 = vector.broadcast %25 : f32 to vector<1x3xf32>
    %49 = arith.mulf %48, %15 : vector<1x3xf32>
    %50 = arith.addf %47, %49 : vector<1x3xf32>
    %51 = vector.broadcast %26 : f32 to vector<1x3xf32>
    %52 = arith.mulf %51, %50 : vector<1x3xf32>
    %53 = arith.addf %16, %52 : vector<1x3xf32>
    %c0_6 = arith.constant 0 : index
    %c0_7 = arith.constant 0 : index
    %54 = vector.load %arg1[%c0_6, %c0_7] : memref<8x3xf32, #tpu.memory_space<vmem>>, vector<1x3xf32>
    tpu.vector_store %arg1[%c0_6, %c0_7], %53 {strides = array<i32>} : memref<8x3xf32, #tpu.memory_space<vmem>>, vector<1x3xf32>,
    %c10 = arith.constant 10 : index
    %55 = memref.load %arg0[%c10] : memref<80xf32, #tpu.memory_space<smem>>
    %c11 = arith.constant 11 : index
    %56 = memref.load %arg0[%c11] : memref<80xf32, #tpu.memory_space<smem>>
    %c12 = arith.constant 12 : index
    %57 = memref.load %arg0[%c12] : memref<80xf32, #tpu.memory_space<smem>>
    %c13 = arith.constant 13 : index
    %58 = memref.load %arg0[%c13] : memref<80xf32, #tpu.memory_space<smem>>
    %c14 = arith.constant 14 : index
    %59 = memref.load %arg0[%c14] : memref<80xf32, #tpu.memory_space<smem>>
    %c15 = arith.constant 15 : index
    %60 = memref.load %arg0[%c15] : memref<80xf32, #tpu.memory_space<smem>>
    %c16 = arith.constant 16 : index
    %61 = memref.load %arg0[%c16] : memref<80xf32, #tpu.memory_space<smem>>
    %c17 = arith.constant 17 : index
    %62 = memref.load %arg0[%c17] : memref<80xf32, #tpu.memory_space<smem>>
    %c18 = arith.constant 18 : index
    %63 = memref.load %arg0[%c18] : memref<80xf32, #tpu.memory_space<smem>>
    %c19 = arith.constant 19 : index
    %64 = memref.load %arg0[%c19] : memref<80xf32, #tpu.memory_space<smem>>
    %65 = vector.broadcast %55 : f32 to vector<1x3xf32>
    %66 = arith.mulf %65, %34 : vector<1x3xf32>
    %67 = vector.broadcast %58 : f32 to vector<1x3xf32>
    %68 = arith.mulf %67, %42 : vector<1x3xf32>
    %69 = arith.addf %66, %68 : vector<1x3xf32>
    %70 = vector.broadcast %61 : f32 to vector<1x3xf32>
    %71 = arith.mulf %70, %50 : vector<1x3xf32>
    %72 = arith.addf %69, %71 : vector<1x3xf32>
    %73 = vector.broadcast %56 : f32 to vector<1x3xf32>
    %74 = arith.mulf %73, %34 : vector<1x3xf32>
    %75 = vector.broadcast %59 : f32 to vector<1x3xf32>
    %76 = arith.mulf %75, %42 : vector<1x3xf32>
    %77 = arith.addf %74, %76 : vector<1x3xf32>
    %78 = vector.broadcast %62 : f32 to vector<1x3xf32>
    %79 = arith.mulf %78, %50 : vector<1x3xf32>
    %80 = arith.addf %77, %79 : vector<1x3xf32>
    %81 = vector.broadcast %57 : f32 to vector<1x3xf32>
    %82 = arith.mulf %81, %34 : vector<1x3xf32>
    %83 = vector.broadcast %60 : f32 to vector<1x3xf32>
    %84 = arith.mulf %83, %42 : vector<1x3xf32>
    %85 = arith.addf %82, %84 : vector<1x3xf32>
    %86 = vector.broadcast %63 : f32 to vector<1x3xf32>
    %87 = arith.mulf %86, %50 : vector<1x3xf32>
    %88 = arith.addf %85, %87 : vector<1x3xf32>
    %89 = vector.broadcast %64 : f32 to vector<1x3xf32>
    %90 = arith.mulf %89, %88 : vector<1x3xf32>
    %91 = arith.addf %53, %90 : vector<1x3xf32>
    %c1_8 = arith.constant 1 : index
    %c0_9 = arith.constant 0 : index
    %92 = vector.load %arg1[%c1_8, %c0_9] : memref<8x3xf32, #tpu.memory_space<vmem>>, vector<1x3xf32>
    tpu.vector_store %arg1[%c1_8, %c0_9], %91 {strides = array<i32>} : memref<8x3xf32, #tpu.memory_space<vmem>>, vector<1x3xf32>,
    %c20 = arith.constant 20 : index
    %93 = memref.load %arg0[%c20] : memref<80xf32, #tpu.memory_space<smem>>
    %c21 = arith.constant 21 : index
    %94 = memref.load %arg0[%c21] : memref<80xf32, #tpu.memory_space<smem>>
    %c22 = arith.constant 22 : index
    %95 = memref.load %arg0[%c22] : memref<80xf32, #tpu.memory_space<smem>>
    %c23 = arith.constant 23 : index
    %96 = memref.load %arg0[%c23] : memref<80xf32, #tpu.memory_space<smem>>
    %c24 = arith.constant 24 : index
    %97 = memref.load %arg0[%c24] : memref<80xf32, #tpu.memory_space<smem>>
    %c25 = arith.constant 25 : index
    %98 = memref.load %arg0[%c25] : memref<80xf32, #tpu.memory_space<smem>>
    %c26 = arith.constant 26 : index
    %99 = memref.load %arg0[%c26] : memref<80xf32, #tpu.memory_space<smem>>
    %c27 = arith.constant 27 : index
    %100 = memref.load %arg0[%c27] : memref<80xf32, #tpu.memory_space<smem>>
    %c28 = arith.constant 28 : index
    %101 = memref.load %arg0[%c28] : memref<80xf32, #tpu.memory_space<smem>>
    %c29 = arith.constant 29 : index
    %102 = memref.load %arg0[%c29] : memref<80xf32, #tpu.memory_space<smem>>
    %103 = vector.broadcast %93 : f32 to vector<1x3xf32>
    %104 = arith.mulf %103, %72 : vector<1x3xf32>
    %105 = vector.broadcast %96 : f32 to vector<1x3xf32>
    %106 = arith.mulf %105, %80 : vector<1x3xf32>
    %107 = arith.addf %104, %106 : vector<1x3xf32>
    %108 = vector.broadcast %99 : f32 to vector<1x3xf32>
    %109 = arith.mulf %108, %88 : vector<1x3xf32>
    %110 = arith.addf %107, %109 : vector<1x3xf32>
    %111 = vector.broadcast %94 : f32 to vector<1x3xf32>
    %112 = arith.mulf %111, %72 : vector<1x3xf32>
    %113 = vector.broadcast %97 : f32 to vector<1x3xf32>
    %114 = arith.mulf %113, %80 : vector<1x3xf32>
    %115 = arith.addf %112, %114 : vector<1x3xf32>
    %116 = vector.broadcast %100 : f32 to vector<1x3xf32>
    %117 = arith.mulf %116, %88 : vector<1x3xf32>
    %118 = arith.addf %115, %117 : vector<1x3xf32>
    %119 = vector.broadcast %95 : f32 to vector<1x3xf32>
    %120 = arith.mulf %119, %72 : vector<1x3xf32>
    %121 = vector.broadcast %98 : f32 to vector<1x3xf32>
    %122 = arith.mulf %121, %80 : vector<1x3xf32>
    %123 = arith.addf %120, %122 : vector<1x3xf32>
    %124 = vector.broadcast %101 : f32 to vector<1x3xf32>
    %125 = arith.mulf %124, %88 : vector<1x3xf32>
    %126 = arith.addf %123, %125 : vector<1x3xf32>
    %127 = vector.broadcast %102 : f32 to vector<1x3xf32>
    %128 = arith.mulf %127, %126 : vector<1x3xf32>
    %129 = arith.addf %91, %128 : vector<1x3xf32>
    %c2_10 = arith.constant 2 : index
    %c0_11 = arith.constant 0 : index
    %130 = vector.load %arg1[%c2_10, %c0_11] : memref<8x3xf32, #tpu.memory_space<vmem>>, vector<1x3xf32>
    tpu.vector_store %arg1[%c2_10, %c0_11], %129 {strides = array<i32>} : memref<8x3xf32, #tpu.memory_space<vmem>>, vector<1x3xf32>,
    %c30 = arith.constant 30 : index
    %131 = memref.load %arg0[%c30] : memref<80xf32, #tpu.memory_space<smem>>
    %c31 = arith.constant 31 : index
    %132 = memref.load %arg0[%c31] : memref<80xf32, #tpu.memory_space<smem>>
    %c32 = arith.constant 32 : index
    %133 = memref.load %arg0[%c32] : memref<80xf32, #tpu.memory_space<smem>>
    %c33 = arith.constant 33 : index
    %134 = memref.load %arg0[%c33] : memref<80xf32, #tpu.memory_space<smem>>
    %c34 = arith.constant 34 : index
    %135 = memref.load %arg0[%c34] : memref<80xf32, #tpu.memory_space<smem>>
    %c35 = arith.constant 35 : index
    %136 = memref.load %arg0[%c35] : memref<80xf32, #tpu.memory_space<smem>>
    %c36 = arith.constant 36 : index
    %137 = memref.load %arg0[%c36] : memref<80xf32, #tpu.memory_space<smem>>
    %c37 = arith.constant 37 : index
    %138 = memref.load %arg0[%c37] : memref<80xf32, #tpu.memory_space<smem>>
    %c38 = arith.constant 38 : index
    %139 = memref.load %arg0[%c38] : memref<80xf32, #tpu.memory_space<smem>>
    %c39 = arith.constant 39 : index
    %140 = memref.load %arg0[%c39] : memref<80xf32, #tpu.memory_space<smem>>
    %141 = vector.broadcast %131 : f32 to vector<1x3xf32>
    %142 = arith.mulf %141, %110 : vector<1x3xf32>
    %143 = vector.broadcast %134 : f32 to vector<1x3xf32>
    %144 = arith.mulf %143, %118 : vector<1x3xf32>
    %145 = arith.addf %142, %144 : vector<1x3xf32>
    %146 = vector.broadcast %137 : f32 to vector<1x3xf32>
    %147 = arith.mulf %146, %126 : vector<1x3xf32>
    %148 = arith.addf %145, %147 : vector<1x3xf32>
    %149 = vector.broadcast %132 : f32 to vector<1x3xf32>
    %150 = arith.mulf %149, %110 : vector<1x3xf32>
    %151 = vector.broadcast %135 : f32 to vector<1x3xf32>
    %152 = arith.mulf %151, %118 : vector<1x3xf32>
    %153 = arith.addf %150, %152 : vector<1x3xf32>
    %154 = vector.broadcast %138 : f32 to vector<1x3xf32>
    %155 = arith.mulf %154, %126 : vector<1x3xf32>
    %156 = arith.addf %153, %155 : vector<1x3xf32>
    %157 = vector.broadcast %133 : f32 to vector<1x3xf32>
    %158 = arith.mulf %157, %110 : vector<1x3xf32>
    %159 = vector.broadcast %136 : f32 to vector<1x3xf32>
    %160 = arith.mulf %159, %118 : vector<1x3xf32>
    %161 = arith.addf %158, %160 : vector<1x3xf32>
    %162 = vector.broadcast %139 : f32 to vector<1x3xf32>
    %163 = arith.mulf %162, %126 : vector<1x3xf32>
    %164 = arith.addf %161, %163 : vector<1x3xf32>
    %165 = vector.broadcast %140 : f32 to vector<1x3xf32>
    %166 = arith.mulf %165, %164 : vector<1x3xf32>
    %167 = arith.addf %129, %166 : vector<1x3xf32>
    %c3_12 = arith.constant 3 : index
    %c0_13 = arith.constant 0 : index
    %168 = vector.load %arg1[%c3_12, %c0_13] : memref<8x3xf32, #tpu.memory_space<vmem>>, vector<1x3xf32>
    tpu.vector_store %arg1[%c3_12, %c0_13], %167 {strides = array<i32>} : memref<8x3xf32, #tpu.memory_space<vmem>>, vector<1x3xf32>,
    %c40 = arith.constant 40 : index
    %169 = memref.load %arg0[%c40] : memref<80xf32, #tpu.memory_space<smem>>
    %c41 = arith.constant 41 : index
    %170 = memref.load %arg0[%c41] : memref<80xf32, #tpu.memory_space<smem>>
    %c42 = arith.constant 42 : index
    %171 = memref.load %arg0[%c42] : memref<80xf32, #tpu.memory_space<smem>>
    %c43 = arith.constant 43 : index
    %172 = memref.load %arg0[%c43] : memref<80xf32, #tpu.memory_space<smem>>
    %c44 = arith.constant 44 : index
    %173 = memref.load %arg0[%c44] : memref<80xf32, #tpu.memory_space<smem>>
    %c45 = arith.constant 45 : index
    %174 = memref.load %arg0[%c45] : memref<80xf32, #tpu.memory_space<smem>>
    %c46 = arith.constant 46 : index
    %175 = memref.load %arg0[%c46] : memref<80xf32, #tpu.memory_space<smem>>
    %c47 = arith.constant 47 : index
    %176 = memref.load %arg0[%c47] : memref<80xf32, #tpu.memory_space<smem>>
    %c48 = arith.constant 48 : index
    %177 = memref.load %arg0[%c48] : memref<80xf32, #tpu.memory_space<smem>>
    %c49 = arith.constant 49 : index
    %178 = memref.load %arg0[%c49] : memref<80xf32, #tpu.memory_space<smem>>
    %179 = vector.broadcast %169 : f32 to vector<1x3xf32>
    %180 = arith.mulf %179, %148 : vector<1x3xf32>
    %181 = vector.broadcast %172 : f32 to vector<1x3xf32>
    %182 = arith.mulf %181, %156 : vector<1x3xf32>
    %183 = arith.addf %180, %182 : vector<1x3xf32>
    %184 = vector.broadcast %175 : f32 to vector<1x3xf32>
    %185 = arith.mulf %184, %164 : vector<1x3xf32>
    %186 = arith.addf %183, %185 : vector<1x3xf32>
    %187 = vector.broadcast %170 : f32 to vector<1x3xf32>
    %188 = arith.mulf %187, %148 : vector<1x3xf32>
    %189 = vector.broadcast %173 : f32 to vector<1x3xf32>
    %190 = arith.mulf %189, %156 : vector<1x3xf32>
    %191 = arith.addf %188, %190 : vector<1x3xf32>
    %192 = vector.broadcast %176 : f32 to vector<1x3xf32>
    %193 = arith.mulf %192, %164 : vector<1x3xf32>
    %194 = arith.addf %191, %193 : vector<1x3xf32>
    %195 = vector.broadcast %171 : f32 to vector<1x3xf32>
    %196 = arith.mulf %195, %148 : vector<1x3xf32>
    %197 = vector.broadcast %174 : f32 to vector<1x3xf32>
    %198 = arith.mulf %197, %156 : vector<1x3xf32>
    %199 = arith.addf %196, %198 : vector<1x3xf32>
    %200 = vector.broadcast %177 : f32 to vector<1x3xf32>
    %201 = arith.mulf %200, %164 : vector<1x3xf32>
    %202 = arith.addf %199, %201 : vector<1x3xf32>
    %203 = vector.broadcast %178 : f32 to vector<1x3xf32>
    %204 = arith.mulf %203, %202 : vector<1x3xf32>
    %205 = arith.addf %167, %204 : vector<1x3xf32>
    %c4_14 = arith.constant 4 : index
    %c0_15 = arith.constant 0 : index
    %206 = vector.load %arg1[%c4_14, %c0_15] : memref<8x3xf32, #tpu.memory_space<vmem>>, vector<1x3xf32>
    tpu.vector_store %arg1[%c4_14, %c0_15], %205 {strides = array<i32>} : memref<8x3xf32, #tpu.memory_space<vmem>>, vector<1x3xf32>,
    %c50 = arith.constant 50 : index
    %207 = memref.load %arg0[%c50] : memref<80xf32, #tpu.memory_space<smem>>
    %c51 = arith.constant 51 : index
    %208 = memref.load %arg0[%c51] : memref<80xf32, #tpu.memory_space<smem>>
    %c52 = arith.constant 52 : index
    %209 = memref.load %arg0[%c52] : memref<80xf32, #tpu.memory_space<smem>>
    %c53 = arith.constant 53 : index
    %210 = memref.load %arg0[%c53] : memref<80xf32, #tpu.memory_space<smem>>
    %c54 = arith.constant 54 : index
    %211 = memref.load %arg0[%c54] : memref<80xf32, #tpu.memory_space<smem>>
    %c55 = arith.constant 55 : index
    %212 = memref.load %arg0[%c55] : memref<80xf32, #tpu.memory_space<smem>>
    %c56 = arith.constant 56 : index
    %213 = memref.load %arg0[%c56] : memref<80xf32, #tpu.memory_space<smem>>
    %c57 = arith.constant 57 : index
    %214 = memref.load %arg0[%c57] : memref<80xf32, #tpu.memory_space<smem>>
    %c58 = arith.constant 58 : index
    %215 = memref.load %arg0[%c58] : memref<80xf32, #tpu.memory_space<smem>>
    %c59 = arith.constant 59 : index
    %216 = memref.load %arg0[%c59] : memref<80xf32, #tpu.memory_space<smem>>
    %217 = vector.broadcast %207 : f32 to vector<1x3xf32>
    %218 = arith.mulf %217, %186 : vector<1x3xf32>
    %219 = vector.broadcast %210 : f32 to vector<1x3xf32>
    %220 = arith.mulf %219, %194 : vector<1x3xf32>
    %221 = arith.addf %218, %220 : vector<1x3xf32>
    %222 = vector.broadcast %213 : f32 to vector<1x3xf32>
    %223 = arith.mulf %222, %202 : vector<1x3xf32>
    %224 = arith.addf %221, %223 : vector<1x3xf32>
    %225 = vector.broadcast %208 : f32 to vector<1x3xf32>
    %226 = arith.mulf %225, %186 : vector<1x3xf32>
    %227 = vector.broadcast %211 : f32 to vector<1x3xf32>
    %228 = arith.mulf %227, %194 : vector<1x3xf32>
    %229 = arith.addf %226, %228 : vector<1x3xf32>
    %230 = vector.broadcast %214 : f32 to vector<1x3xf32>
    %231 = arith.mulf %230, %202 : vector<1x3xf32>
    %232 = arith.addf %229, %231 : vector<1x3xf32>
    %233 = vector.broadcast %209 : f32 to vector<1x3xf32>
    %234 = arith.mulf %233, %186 : vector<1x3xf32>
    %235 = vector.broadcast %212 : f32 to vector<1x3xf32>
    %236 = arith.mulf %235, %194 : vector<1x3xf32>
    %237 = arith.addf %234, %236 : vector<1x3xf32>
    %238 = vector.broadcast %215 : f32 to vector<1x3xf32>
    %239 = arith.mulf %238, %202 : vector<1x3xf32>
    %240 = arith.addf %237, %239 : vector<1x3xf32>
    %241 = vector.broadcast %216 : f32 to vector<1x3xf32>
    %242 = arith.mulf %241, %240 : vector<1x3xf32>
    %243 = arith.addf %205, %242 : vector<1x3xf32>
    %c5_16 = arith.constant 5 : index
    %c0_17 = arith.constant 0 : index
    %244 = vector.load %arg1[%c5_16, %c0_17] : memref<8x3xf32, #tpu.memory_space<vmem>>, vector<1x3xf32>
    tpu.vector_store %arg1[%c5_16, %c0_17], %243 {strides = array<i32>} : memref<8x3xf32, #tpu.memory_space<vmem>>, vector<1x3xf32>,
    %c60 = arith.constant 60 : index
    %245 = memref.load %arg0[%c60] : memref<80xf32, #tpu.memory_space<smem>>
    %c61 = arith.constant 61 : index
    %246 = memref.load %arg0[%c61] : memref<80xf32, #tpu.memory_space<smem>>
    %c62 = arith.constant 62 : index
    %247 = memref.load %arg0[%c62] : memref<80xf32, #tpu.memory_space<smem>>
    %c63 = arith.constant 63 : index
    %248 = memref.load %arg0[%c63] : memref<80xf32, #tpu.memory_space<smem>>
    %c64 = arith.constant 64 : index
    %249 = memref.load %arg0[%c64] : memref<80xf32, #tpu.memory_space<smem>>
    %c65 = arith.constant 65 : index
    %250 = memref.load %arg0[%c65] : memref<80xf32, #tpu.memory_space<smem>>
    %c66 = arith.constant 66 : index
    %251 = memref.load %arg0[%c66] : memref<80xf32, #tpu.memory_space<smem>>
    %c67 = arith.constant 67 : index
    %252 = memref.load %arg0[%c67] : memref<80xf32, #tpu.memory_space<smem>>
    %c68 = arith.constant 68 : index
    %253 = memref.load %arg0[%c68] : memref<80xf32, #tpu.memory_space<smem>>
    %c69 = arith.constant 69 : index
    %254 = memref.load %arg0[%c69] : memref<80xf32, #tpu.memory_space<smem>>
    %255 = vector.broadcast %245 : f32 to vector<1x3xf32>
    %256 = arith.mulf %255, %224 : vector<1x3xf32>
    %257 = vector.broadcast %248 : f32 to vector<1x3xf32>
    %258 = arith.mulf %257, %232 : vector<1x3xf32>
    %259 = arith.addf %256, %258 : vector<1x3xf32>
    %260 = vector.broadcast %251 : f32 to vector<1x3xf32>
    %261 = arith.mulf %260, %240 : vector<1x3xf32>
    %262 = arith.addf %259, %261 : vector<1x3xf32>
    %263 = vector.broadcast %246 : f32 to vector<1x3xf32>
    %264 = arith.mulf %263, %224 : vector<1x3xf32>
    %265 = vector.broadcast %249 : f32 to vector<1x3xf32>
    %266 = arith.mulf %265, %232 : vector<1x3xf32>
    %267 = arith.addf %264, %266 : vector<1x3xf32>
    %268 = vector.broadcast %252 : f32 to vector<1x3xf32>
    %269 = arith.mulf %268, %240 : vector<1x3xf32>
    %270 = arith.addf %267, %269 : vector<1x3xf32>
    %271 = vector.broadcast %247 : f32 to vector<1x3xf32>
    %272 = arith.mulf %271, %224 : vector<1x3xf32>
    %273 = vector.broadcast %250 : f32 to vector<1x3xf32>
    %274 = arith.mulf %273, %232 : vector<1x3xf32>
    %275 = arith.addf %272, %274 : vector<1x3xf32>
    %276 = vector.broadcast %253 : f32 to vector<1x3xf32>
    %277 = arith.mulf %276, %240 : vector<1x3xf32>
    %278 = arith.addf %275, %277 : vector<1x3xf32>
    %279 = vector.broadcast %254 : f32 to vector<1x3xf32>
    %280 = arith.mulf %279, %278 : vector<1x3xf32>
    %281 = arith.addf %243, %280 : vector<1x3xf32>
    %c6_18 = arith.constant 6 : index
    %c0_19 = arith.constant 0 : index
    %282 = vector.load %arg1[%c6_18, %c0_19] : memref<8x3xf32, #tpu.memory_space<vmem>>, vector<1x3xf32>
    tpu.vector_store %arg1[%c6_18, %c0_19], %281 {strides = array<i32>} : memref<8x3xf32, #tpu.memory_space<vmem>>, vector<1x3xf32>,
    %c72 = arith.constant 72 : index
    %283 = memref.load %arg0[%c72] : memref<80xf32, #tpu.memory_space<smem>>
    %c75 = arith.constant 75 : index
    %284 = memref.load %arg0[%c75] : memref<80xf32, #tpu.memory_space<smem>>
    %c78 = arith.constant 78 : index
    %285 = memref.load %arg0[%c78] : memref<80xf32, #tpu.memory_space<smem>>
    %c79 = arith.constant 79 : index
    %286 = memref.load %arg0[%c79] : memref<80xf32, #tpu.memory_space<smem>>
    %287 = vector.broadcast %283 : f32 to vector<1x3xf32>
    %288 = arith.mulf %287, %262 : vector<1x3xf32>
    %289 = vector.broadcast %284 : f32 to vector<1x3xf32>
    %290 = arith.mulf %289, %270 : vector<1x3xf32>
    %291 = arith.addf %288, %290 : vector<1x3xf32>
    %292 = vector.broadcast %285 : f32 to vector<1x3xf32>
    %293 = arith.mulf %292, %278 : vector<1x3xf32>
    %294 = arith.addf %291, %293 : vector<1x3xf32>
    %295 = vector.broadcast %286 : f32 to vector<1x3xf32>
    %296 = arith.mulf %295, %294 : vector<1x3xf32>
    %297 = arith.addf %281, %296 : vector<1x3xf32>
    %c7_20 = arith.constant 7 : index
    %c0_21 = arith.constant 0 : index
    %298 = vector.load %arg1[%c7_20, %c0_21] : memref<8x3xf32, #tpu.memory_space<vmem>>, vector<1x3xf32>
    tpu.vector_store %arg1[%c7_20, %c0_21], %297 {strides = array<i32>} : memref<8x3xf32, #tpu.memory_space<vmem>>, vector<1x3xf32>,
    return
  }
}

</mosaic_0001>

<llo_original>
// kernel: forward_kinematics.1
$region0: #{forward_kinematics.1}
  #allocation0 [shape = 'u32[]', space=smem, size = 0x4, offset = 0x4, fixed_abs, tag = 'smem constant byte address 0x4 - core index']
  #allocation1 [shape = 'u32[144,128]{1,0:T(1,128)}', space=vmem, size = 0x12000, scoped, tag = 'internal scratch']
  %s0 = inlined_call_operand.vmem [shape: f32[80], index: 0, kind: input, shape index: {}]
  %s1 = inlined_call_operand.vmem [shape: f32[8,3], index: 1, kind: output, shape index: {}]
  %s2 = sld [smem:[#allocation0]]
  $region18: #{forward_kinematics.1} parent=0
    _
  %s4 = ssub.s32 1, %s2
  %s5 = scalar_select 0, %s4, %s2
  $region1: #{forward_kinematics.1} parent=0
    #allocation2 [shape = 'u8[512]{0}', space=smem, size = 0x200, scoped, tag = 'input window, operand 0, single buffered']
    #allocation3 [shape = 's32[1]{0}', space=sflag, size = 0x4, scoped, tag = 'scoped memory for forward_kinematics.1']
    %6 = vsyncpa [#allocation3], 0
    // Predicated region
    $region2: #{forward_kinematics.1} parent=1 // pred_check
      _
    $region3: #{forward_kinematics.1} parent=1 // pred_check_branch
      %8 = sbr.rel (0) target = $region5
    $region4: #{forward_kinematics.1} parent=1 // pred_region
      %s10 = ssub.s32 16, 16
      %11 = vsyncadd [#allocation3], %s10
      %s13 = sshll.u32 %s0, 4
      %s14 = int_to_ptr.vmem [resolvable:$true] %s13
      %16 = dma.vmem_to_smem %s14, 16, [#allocation2], [#allocation3]
    $region5: #{forward_kinematics.1} parent=1 // pred_fallthru
      _
    // Predicated region
    $region6: #{forward_kinematics.1} parent=1 // pred_check
      _
    $region7: #{forward_kinematics.1} parent=1 // pred_check_branch
      %18 = sbr.rel (0) target = $region9
    $region8: #{forward_kinematics.1} parent=1 // pred_region
      %19 = dma.done [#allocation3], 16
    $region9: #{forward_kinematics.1} parent=1 // pred_fallthru
      _
    %20 = sfence
    %v21 = vlaneseq
    %v22 = vand.u32 %v21, 127
    %vm23 = vcmp.eq.s32.totalorder %v22, 0
    %v24 = vsel %vm23, 1.0, 0.0
    %vm25 = vcmp.eq.s32.totalorder %v22, 1
    %v26 = vsel %vm25, 1.0, 0.0
    %vm27 = vcmp.eq.s32.totalorder %v22, 2
    %v28 = vsel %vm27, 1.0, 0.0
    %s29 = sld [smem:[#allocation2]]
    %s30 = sld [smem:[#allocation2 + $0x1]]
    %s31 = sld [smem:[#allocation2 + $0x2]]
    %s32 = sld [smem:[#allocation2 + $0x3]]
    %s33 = sld [smem:[#allocation2 + $0x4]]
    %s34 = sld [smem:[#allocation2 + $0x5]]
    %s35 = sld [smem:[#allocation2 + $0x6]]
    %s36 = sld [smem:[#allocation2 + $0x7]]
    %s37 = sld [smem:[#allocation2 + $0x8]]
    %s38 = sld [smem:[#allocation2 + $0x9]]
    %v39 = vstv %s29
    %v40 = vmul.f32 %v39, %v24
    %v41 = vstv %s32
    %v42 = vmul.f32 %v41, %v26
    %v43 = vadd.f32 %v40, %v42
    %v44 = vstv %s35
    %v45 = vmul.f32 %v44, %v28
    %v46 = vadd.f32 %v43, %v45
    %v47 = vstv %s30
    %v48 = vmul.f32 %v47, %v24
    %v49 = vstv %s33
    %v50 = vmul.f32 %v49, %v26
    %v51 = vadd.f32 %v48, %v50
    %v52 = vstv %s36
    %v53 = vmul.f32 %v52, %v28
    %v54 = vadd.f32 %v51, %v53
    %v55 = vstv %s31
    %v56 = vmul.f32 %v55, %v24
    %v57 = vstv %s34
    %v58 = vmul.f32 %v57, %v26
    %v59 = vadd.f32 %v56, %v58
    %v60 = vstv %s37
    %v61 = vmul.f32 %v60, %v28
    %v62 = vadd.f32 %v59, %v61
    %v63 = vstv %s38
    %v64 = vmul.f32 %v63, %v62
    %v65 = vadd.f32 %v64, 0.0
    %vm66 = vcmask 16384
    %67 = vst.msk [vmem:[%s1] sm:$0x1] %vm66, %v65
    %s68 = sld [smem:[#allocation2 + $0xa]]
    %s69 = sld [smem:[#allocation2 + $0xb]]
    %s70 = sld [smem:[#allocation2 + $0xc]]
    %s71 = sld [smem:[#allocation2 + $0xd]]
    %s72 = sld [smem:[#allocation2 + $0xe]]
    %s73 = sld [smem:[#allocation2 + $0xf]]
    %s74 = sld [smem:[#allocation2 + $0x10]]
    %s75 = sld [smem:[#allocation2 + $0x11]]
    %s76 = sld [smem:[#allocation2 + $0x12]]
    %s77 = sld [smem:[#allocation2 + $0x13]]
    %v78 = vstv %s68
    %v79 = vmul.f32 %v78, %v46
    %v80 = vstv %s71
    %v81 = vmul.f32 %v80, %v54
    %v82 = vadd.f32 %v79, %v81
    %v83 = vstv %s74
    %v84 = vmul.f32 %v83, %v62
    %v85 = vadd.f32 %v82, %v84
    %v86 = vstv %s69
    %v87 = vmul.f32 %v86, %v46
    %v88 = vstv %s72
    %v89 = vmul.f32 %v88, %v54
    %v90 = vadd.f32 %v87, %v89
    %v91 = vstv %s75
    %v92 = vmul.f32 %v91, %v62
    %v93 = vadd.f32 %v90, %v92
    %v94 = vstv %s70
    %v95 = vmul.f32 %v94, %v46
    %v96 = vstv %s73
    %v97 = vmul.f32 %v96, %v54
    %v98 = vadd.f32 %v95, %v97
    %v99 = vstv %s76
    %v100 = vmul.f32 %v99, %v62
    %v101 = vadd.f32 %v98, %v100
    %v102 = vstv %s77
    %v103 = vmul.f32 %v102, %v101
    %v104 = vadd.f32 %v65, %v103
    %105 = vst.msk [vmem:[%s1 + $0x1] sm:$0x1] %vm66, %v104
    %s106 = sld [smem:[#allocation2 + $0x14]]
    %s107 = sld [smem:[#allocation2 + $0x15]]
    %s108 = sld [smem:[#allocation2 + $0x16]]
    %s109 = sld [smem:[#allocation2 + $0x17]]
    %s110 = sld [smem:[#allocation2 + $0x18]]
    %s111 = sld [smem:[#allocation2 + $0x19]]
    %s112 = sld [smem:[#allocation2 + $0x1a]]
    %s113 = sld [smem:[#allocation2 + $0x1b]]
    %s114 = sld [smem:[#allocation2 + $0x1c]]
    %s115 = sld [smem:[#allocation2 + $0x1d]]
    %v116 = vstv %s106
    %v117 = vmul.f32 %v116, %v85
    %v118 = vstv %s109
    %v119 = vmul.f32 %v118, %v93
    %v120 = vadd.f32 %v117, %v119
    %v121 = vstv %s112
    %v122 = vmul.f32 %v121, %v101
    %v123 = vadd.f32 %v120, %v122
    %v124 = vstv %s107
    %v125 = vmul.f32 %v124, %v85
    %v126 = vstv %s110
    %v127 = vmul.f32 %v126, %v93
    %v128 = vadd.f32 %v125, %v127
    %v129 = vstv %s113
    %v130 = vmul.f32 %v129, %v101
    %v131 = vadd.f32 %v128, %v130
    %v132 = vstv %s108
    %v133 = vmul.f32 %v132, %v85
    %v134 = vstv %s111
    %v135 = vmul.f32 %v134, %v93
    %v136 = vadd.f32 %v133, %v135
    %v137 = vstv %s114
    %v138 = vmul.f32 %v137, %v101
    %v139 = vadd.f32 %v136, %v138
    %v140 = vstv %s115
    %v141 = vmul.f32 %v140, %v139
    %v142 = vadd.f32 %v104, %v141
    %143 = vst.msk [vmem:[%s1 + $0x2] sm:$0x1] %vm66, %v142
    %s144 = sld [smem:[#allocation2 + $0x1e]]
    %s145 = sld [smem:[#allocation2 + $0x1f]]
    %s146 = sld [smem:[#allocation2 + $0x20]]
    %s147 = sld [smem:[#allocation2 + $0x21]]
    %s148 = sld [smem:[#allocation2 + $0x22]]
    %s149 = sld [smem:[#allocation2 + $0x23]]
    %s150 = sld [smem:[#allocation2 + $0x24]]
    %s151 = sld [smem:[#allocation2 + $0x25]]
    %s152 = sld [smem:[#allocation2 + $0x26]]
    %s153 = sld [smem:[#allocation2 + $0x27]]
    %v154 = vstv %s144
    %v155 = vmul.f32 %v154, %v123
    %v156 = vstv %s147
    %v157 = vmul.f32 %v156, %v131
    %v158 = vadd.f32 %v155, %v157
    %v159 = vstv %s150
    %v160 = vmul.f32 %v159, %v139
    %v161 = vadd.f32 %v158, %v160
    %v162 = vstv %s145
    %v163 = vmul.f32 %v162, %v123
    %v164 = vstv %s148
    %v165 = vmul.f32 %v164, %v131
    %v166 = vadd.f32 %v163, %v165
    %v167 = vstv %s151
    %v168 = vmul.f32 %v167, %v139
    %v169 = vadd.f32 %v166, %v168
    %v170 = vstv %s146
    %v171 = vmul.f32 %v170, %v123
    %v172 = vstv %s149
    %v173 = vmul.f32 %v172, %v131
    %v174 = vadd.f32 %v171, %v173
    %v175 = vstv %s152
    %v176 = vmul.f32 %v175, %v139
    %v177 = vadd.f32 %v174, %v176
    %v178 = vstv %s153
    %v179 = vmul.f32 %v178, %v177
    %v180 = vadd.f32 %v142, %v179
    %181 = vst.msk [vmem:[%s1 + $0x3] sm:$0x1] %vm66, %v180
    %s182 = sld [smem:[#allocation2 + $0x28]]
    %s183 = sld [smem:[#allocation2 + $0x29]]
    %s184 = sld [smem:[#allocation2 + $0x2a]]
    %s185 = sld [smem:[#allocation2 + $0x2b]]
    %s186 = sld [smem:[#allocation2 + $0x2c]]
    %s187 = sld [smem:[#allocation2 + $0x2d]]
    %s188 = sld [smem:[#allocation2 + $0x2e]]
    %s189 = sld [smem:[#allocation2 + $0x2f]]
    %s190 = sld [smem:[#allocation2 + $0x30]]
    %s191 = sld [smem:[#allocation2 + $0x31]]
    %v192 = vstv %s182
    %v193 = vmul.f32 %v192, %v161
    %v194 = vstv %s185
    %v195 = vmul.f32 %v194, %v169
    %v196 = vadd.f32 %v193, %v195
    %v197 = vstv %s188
    %v198 = vmul.f32 %v197, %v177
    %v199 = vadd.f32 %v196, %v198
    %v200 = vstv %s183
    %v201 = vmul.f32 %v200, %v161
    %v202 = vstv %s186
    %v203 = vmul.f32 %v202, %v169
    %v204 = vadd.f32 %v201, %v203
    %v205 = vstv %s189
    %v206 = vmul.f32 %v205, %v177
    %v207 = vadd.f32 %v204, %v206
    %v208 = vstv %s184
    %v209 = vmul.f32 %v208, %v161
    %v210 = vstv %s187
    %v211 = vmul.f32 %v210, %v169
    %v212 = vadd.f32 %v209, %v211
    %v213 = vstv %s190
    %v214 = vmul.f32 %v213, %v177
    %v215 = vadd.f32 %v212, %v214
    %v216 = vstv %s191
    %v217 = vmul.f32 %v216, %v215
    %v218 = vadd.f32 %v180, %v217
    %219 = vst.msk [vmem:[%s1 + $0x4] sm:$0x1] %vm66, %v218
    %s220 = sld [smem:[#allocation2 + $0x32]]
    %s221 = sld [smem:[#allocation2 + $0x33]]
    %s222 = sld [smem:[#allocation2 + $0x34]]
    %s223 = sld [smem:[#allocation2 + $0x35]]
    %s224 = sld [smem:[#allocation2 + $0x36]]
    %s225 = sld [smem:[#allocation2 + $0x37]]
    %s226 = sld [smem:[#allocation2 + $0x38]]
    %s227 = sld [smem:[#allocation2 + $0x39]]
    %s228 = sld [smem:[#allocation2 + $0x3a]]
    %s229 = sld [smem:[#allocation2 + $0x3b]]
    %v230 = vstv %s220
    %v231 = vmul.f32 %v230, %v199
    %v232 = vstv %s223
    %v233 = vmul.f32 %v232, %v207
    %v234 = vadd.f32 %v231, %v233
    %v235 = vstv %s226
    %v236 = vmul.f32 %v235, %v215
    %v237 = vadd.f32 %v234, %v236
    %v238 = vstv %s221
    %v239 = vmul.f32 %v238, %v199
    %v240 = vstv %s224
    %v241 = vmul.f32 %v240, %v207
    %v242 = vadd.f32 %v239, %v241
    %v243 = vstv %s227
    %v244 = vmul.f32 %v243, %v215
    %v245 = vadd.f32 %v242, %v244
    %v246 = vstv %s222
    %v247 = vmul.f32 %v246, %v199
    %v248 = vstv %s225
    %v249 = vmul.f32 %v248, %v207
    %v250 = vadd.f32 %v247, %v249
    %v251 = vstv %s228
    %v252 = vmul.f32 %v251, %v215
    %v253 = vadd.f32 %v250, %v252
    %v254 = vstv %s229
    %v255 = vmul.f32 %v254, %v253
    %v256 = vadd.f32 %v218, %v255
    %257 = vst.msk [vmem:[%s1 + $0x5] sm:$0x1] %vm66, %v256
    %s258 = sld [smem:[#allocation2 + $0x3c]]
    %s259 = sld [smem:[#allocation2 + $0x3d]]
    %s260 = sld [smem:[#allocation2 + $0x3e]]
    %s261 = sld [smem:[#allocation2 + $0x3f]]
    %s262 = sld [smem:[#allocation2 + $0x40]]
    %s263 = sld [smem:[#allocation2 + $0x41]]
    %s264 = sld [smem:[#allocation2 + $0x42]]
    %s265 = sld [smem:[#allocation2 + $0x43]]
    %s266 = sld [smem:[#allocation2 + $0x44]]
    %s267 = sld [smem:[#allocation2 + $0x45]]
    %v268 = vstv %s258
    %v269 = vmul.f32 %v268, %v237
    %v270 = vstv %s261
    %v271 = vmul.f32 %v270, %v245
    %v272 = vadd.f32 %v269, %v271
    %v273 = vstv %s264
    %v274 = vmul.f32 %v273, %v253
    %v275 = vadd.f32 %v272, %v274
    %v276 = vstv %s259
    %v277 = vmul.f32 %v276, %v237
    %v278 = vstv %s262
    %v279 = vmul.f32 %v278, %v245
    %v280 = vadd.f32 %v277, %v279
    %v281 = vstv %s265
    %v282 = vmul.f32 %v281, %v253
    %v283 = vadd.f32 %v280, %v282
    %v284 = vstv %s260
    %v285 = vmul.f32 %v284, %v237
    %v286 = vstv %s263
    %v287 = vmul.f32 %v286, %v245
    %v288 = vadd.f32 %v285, %v287
    %v289 = vstv %s266
    %v290 = vmul.f32 %v289, %v253
    %v291 = vadd.f32 %v288, %v290
    %v292 = vstv %s267
    %v293 = vmul.f32 %v292, %v291
    %v294 = vadd.f32 %v256, %v293
    %295 = vst.msk [vmem:[%s1 + $0x6] sm:$0x1] %vm66, %v294
    %s296 = sld [smem:[#allocation2 + $0x48]]
    %s297 = sld [smem:[#allocation2 + $0x4b]]
    %s298 = sld [smem:[#allocation2 + $0x4e]]
    %s299 = sld [smem:[#allocation2 + $0x4f]]
    %v300 = vstv %s296
    %v301 = vmul.f32 %v300, %v275
    %v302 = vstv %s297
    %v303 = vmul.f32 %v302, %v283
    %v304 = vadd.f32 %v301, %v303
    %v305 = vstv %s298
    %v306 = vmul.f32 %v305, %v291
    %v307 = vadd.f32 %v304, %v306
    %v308 = vstv %s299
    %v309 = vmul.f32 %v308, %v307
    %v310 = vadd.f32 %v294, %v309
    %311 = vst.msk [vmem:[%s1 + $0x7] sm:$0x1] %vm66, %v310
    // Predicated region
    $region10: #{forward_kinematics.1} parent=1 // pred_check
      _
    $region11: #{forward_kinematics.1} parent=1 // pred_check_branch
      %313 = sbr.rel (0) target = $region13
    $region12: #{forward_kinematics.1} parent=1 // pred_region
      _
    $region13: #{forward_kinematics.1} parent=1 // pred_fallthru
      _
    // Predicated region
    $region14: #{forward_kinematics.1} parent=1 // pred_check
      _
    $region15: #{forward_kinematics.1} parent=1 // pred_check_branch
      %315 = sbr.rel (0) target = $region17
    $region16: #{forward_kinematics.1} parent=1 // pred_region
      _
    $region17: #{forward_kinematics.1} parent=1 // pred_fallthru
      _
    %316 = vsyncpa [#allocation3], 1

</llo_original>
